<compile_context>
chip_gen: v5e
topology: v5e:2x2
jax: 0.10.0
libtpu: 0.0.40
codegen_flags: <defaults>
</compile_context>

<pallas_src>
import numpy as np
import jax
import jax.numpy as jnp
from jax.experimental import pallas as pl
from jax.experimental.pallas import tpu as pltpu

COMPUTE_DTYPE = jnp.bfloat16   # MXU operand dtype; accumulation stays f32


# ----------------------------------------------------------------------------
# Host-side (numpy) mask construction — identical semantics to the PyTorch
# module's `opt_type='greedy'` path.  Parameter setup, not the hot path.
# TODO(synk): the gurobi-based mask variants ('IP', 'IP_alt', 'LP_relax',
#             'IP_var') are an external MIP solver and have no Pallas equivalent.
# ----------------------------------------------------------------------------
def optimize_single_mask_greedy(A, n_hidden):
    A_nonzero = A[~np.all(A == 0, axis=1), :]
    n_nonzero_rows = A_nonzero.shape[0]
    M2 = np.zeros((n_hidden, A.shape[1]))
    for i in range(n_hidden):
        M2[i, :] = A_nonzero[i % n_nonzero_rows]
    M1 = np.ones((A.shape[0], n_hidden))
    for i in range(M1.shape[0]):
        Ai_zero = np.where(A[i, :] == 0)[0]
        row_idx = np.unique(np.where(M2[:, Ai_zero] == 1)[0])
        M1[i, row_idx] = 0.0
    return M1, M2


def optimize_all_masks(hidden_sizes, A):
    masks = []
    constraint = np.copy(A)
    M1 = None
    for l in hidden_sizes:
        M1, M2 = optimize_single_mask_greedy(constraint, l)
        constraint = M1
        masks = masks + [M2.T]
    masks = masks + [M1.T]
    return masks


def check_masks(mask_list, A):
    mask_prod = mask_list[-1].T
    for i in np.arange(len(mask_list) - 2, -1, -1):
        mask_prod = np.dot(mask_prod, mask_list[i].T)
    constraint = (mask_prod > 0) * 1.0 - A
    if np.any(constraint != 0.0):
        raise ValueError("Constraints are not met. Do not proceed with masks.")


# ----------------------------------------------------------------------------
# Pallas kernel: full masked MLP (3 MaskedLinear layers, ReLU in between),
# computed feature-major so the batch dimension is lane-dense throughout.
#   z_ref : (nin_total, tb)  bf16   (streams per grid step)
#   w*    : (out, in)        bf16   (VMEM-resident, pre-masked)
#   b*    : (out, 1)         f32
#   o_ref : (nout_eff, tb)   f32    (context outputs already trimmed away,
#                                    rows in (nin, k)-major order)
# ----------------------------------------------------------------------------
def made_mlp_kernel(z_ref, w0_ref, b0_ref, w1_ref, b1_ref, w2_ref, b2_ref, o_ref):
    h = jnp.dot(w0_ref[...], z_ref[...], preferred_element_type=jnp.float32)
    h = jnp.maximum(h + b0_ref[...], 0.0).astype(COMPUTE_DTYPE)
    h = jnp.dot(w1_ref[...], h, preferred_element_type=jnp.float32)
    h = jnp.maximum(h + b1_ref[...], 0.0).astype(COMPUTE_DTYPE)
    o = jnp.dot(w2_ref[...], h, preferred_element_type=jnp.float32) + b2_ref[...]
    o_ref[...] = o.astype(o_ref.dtype)


class ConditionalMADEPallas:
    """JAX/Pallas re-implementation of ConditionalMADE forward (2 hidden layers)."""

    MAX_TILE = 2048   # batch lanes per grid step; big tiles amortize step overhead

    def __init__(self, nin, cond_in, hidden_sizes, nout, A_prior, key):
        assert len(hidden_sizes) == 2, "kernel is written for 2 hidden layers"
        assert cond_in > 0, "ConditionalMADE expects a conditioning input"
        self.nin_non_cond = nin
        self.cond_in = cond_in
        self.nin_total = nin + cond_in
        self.nout = nout
        self.hidden_sizes = list(hidden_sizes)
        assert self.nout % self.nin_total == 0, "nout must be integer multiple of nin"
        self.k = self.nout // self.nin_total
        self.nout_eff = self.nin_non_cond * self.k   # only non-context outputs

        # --- masks (greedy optimization, as in the torch module) ---
        masks = optimize_all_masks(self.hidden_sizes, A_prior)
        check_masks(masks, A_prior)
        if self.nout > self.nin_total:
            masks[-1] = np.concatenate([masks[-1]] * self.k, axis=1)

        # --- deterministic parameter init (nn.Linear-style uniform) ---
        hs = [self.nin_total] + self.hidden_sizes + [self.nout]
        w_full, b_full = [], []
        for li, (h_in, h_out) in enumerate(zip(hs, hs[1:])):
            key, kw, kb = jax.random.split(key, 3)
            bound = 1.0 / np.sqrt(h_in)
            W = jax.random.uniform(kw, (h_out, h_in), jnp.float32, -bound, bound)  # (out, in)
            b = jax.random.uniform(kb, (h_out,), jnp.float32, -bound, bound)
            mask_oi = jnp.asarray(masks[li], jnp.float32).T                         # (out, in)
            w_full.append(mask_oi * W)                                              # masked, f32
            b_full.append(b)

        # kernel operands: bf16 weights (out, in), f32 biases (out, 1)
        self.w0 = w_full[0].astype(COMPUTE_DTYPE)        # (h1, nin_total)
        self.b0 = b_full[0].reshape(-1, 1)
        self.w1 = w_full[1].astype(COMPUTE_DTYPE)        # (h2, h1)
        self.b1 = b_full[1].reshape(-1, 1)
        # layer 2: drop context output rows, permute to (nin, k)-major order:
        #   new row c = i*k + j  <-  old output row j*nin_total + cond_in + i
        idx = np.asarray(
            [j * self.nin_total + self.cond_in + i
             for i in range(self.nin_non_cond) for j in range(self.k)],
            dtype=np.int32)
        self.w2 = w_full[2][idx, :].astype(COMPUTE_DTYPE)   # (nout_eff, h2)
        self.b2 = b_full[2][idx].reshape(-1, 1)

        # f32 full-width copies for the pure-JAX module-semantics reference
        self._w0_full, self._b0_full = w_full[0], b_full[0]
        self._w1_full, self._b1_full = w_full[1], b_full[1]
        self._w2_full, self._b2_full = w_full[2], b_full[2]

    # ---- batch-lane tile choice ----
    @staticmethod
    def _choose_tile(B):
        if B <= 128:
            return B                     # single block; lane dim == full batch
        # keep >= 4 grid steps when B is large so v7x can shard across 2 TCs,
        # otherwise maximize the tile (grid-step overhead ~0.35us dominates)
        quarter = -(-B // 4)
        tb = ((quarter + 127) // 128) * 128
        return min(ConditionalMADEPallas.MAX_TILE, tb)

    # ---- hot path: pallas_call over batch-lane tiles (feature-major) ----
    def _mlp_T(self, z_t):
        nin_total, B = z_t.shape
        tb = self._choose_tile(B)
        grid = (pl.cdiv(B, tb),)
        h1, h2 = self.hidden_sizes
        nout_eff = self.nout_eff

        wt_bytes = int((self.w0.size + self.w1.size + self.w2.size) * 2
                       + (self.b0.size + self.b1.size + self.b2.size) * 4)
        tile_bytes = int(nin_total * tb * 2 + nout_eff * tb * 4)
        vmem_limit = min(int(2 * tile_bytes + 2 * wt_bytes) + (4 << 20), 64 << 20)

        flops = 2 * B * (nin_total * h1 + h1 * h2 + h2 * nout_eff)
        bytes_accessed = int(nin_total * B * 2 + wt_bytes + nout_eff * B * 4)

        return pl.pallas_call(
            made_mlp_kernel,
            out_shape=jax.ShapeDtypeStruct((nout_eff, B), jnp.float32),
            grid_spec=pltpu.PrefetchScalarGridSpec(
                num_scalar_prefetch=0,
                grid=grid,
                in_specs=[
                    pl.BlockSpec((nin_total, tb), lambda i: (0, i)),   # z tile (streams)
                    pl.BlockSpec((h1, nin_total), lambda i: (0, 0)),   # w0 (resident)
                    pl.BlockSpec((h1, 1), lambda i: (0, 0)),           # b0
                    pl.BlockSpec((h2, h1), lambda i: (0, 0)),          # w1
                    pl.BlockSpec((h2, 1), lambda i: (0, 0)),           # b1
                    pl.BlockSpec((nout_eff, h2), lambda i: (0, 0)),    # w2 (trimmed)
                    pl.BlockSpec((nout_eff, 1), lambda i: (0, 0)),     # b2 (trimmed)
                ],
                out_specs=pl.BlockSpec((nout_eff, tb), lambda i: (0, i)),
            ),
            compiler_params=pltpu.CompilerParams(
                dimension_semantics=("parallel",),
                vmem_limit_bytes=vmem_limit),
            cost_estimate=pl.CostEstimate(
                flops=flops, bytes_accessed=bytes_accessed, transcendentals=0),
        )(z_t, self.w0, self.b0, self.w1, self.b1, self.w2, self.b2)

    def forward(self, x, context):
        if context is None:
            # original module passes the already-concatenated tensor in this case
            context = x[:, : self.cond_in]
            x = x[:, self.cond_in:]
        B = x.shape[0]
        # feature-major input slab (tiny: nin_total floats per row); the bf16
        # cast rides the same pass as the concat/transpose.
        z_t = jnp.concatenate((context, x), axis=1).T.astype(COMPUTE_DTYPE)
        out_t = self._mlp_T(z_t)                                   # (nout_eff, B), lane-dense
        # rows are already (nin, k)-major -> transpose + reshape == module's
        # reshape/permute/slice on the full output.
        return out_t.T.reshape(B, self.nin_non_cond, self.k)

    # pure-JAX module-semantics reference (f32 math, full output then slice)
    def forward_ref(self, x, context):
        z = jnp.concatenate((context, x), axis=1) if context is not None else x
        h = jnp.maximum(z @ self._w0_full.T + self._b0_full, 0.0)
        h = jnp.maximum(h @ self._w1_full.T + self._b1_full, 0.0)
        out = h @ self._w2_full.T + self._b2_full
        B = z.shape[0]
        out = jnp.transpose(out.reshape(B, self.k, self.nin_total), (0, 2, 1))
        return out[:, self.cond_in:, :]


if __name__ == "__main__":
    # small, module-consistent shapes
    nin, cond_in = 4, 4
    nin_total = nin + cond_in
    hidden_sizes = [32, 32]
    k = 2
    nout = k * nin_total
    B = 16

    # adjacency prior: every x-output sees all context inputs and strictly
    # preceding x inputs; context rows are unconstrained (all-zero, sliced off).
    A_prior = np.zeros((nin_total, nin_total))
    for i in range(cond_in, nin_total):
        A_prior[i, :cond_in] = 1.0
        A_prior[i, cond_in:i] = 1.0

    key = jax.random.PRNGKey(0)
    key, kx, kc, kp = jax.random.split(key, 4)
    x = jax.random.normal(kx, (B, nin), jnp.float32)
    context = jax.random.normal(kc, (B, cond_in), jnp.float32)

    model = ConditionalMADEPallas(nin, cond_in, hidden_sizes, nout, A_prior, kp)

    out = jax.block_until_ready(model.forward(x, context))
    ref = jax.block_until_ready(model.forward_ref(x, context))

    assert out.shape == (B, nin, k), out.shape
    # kernel runs bf16 operands with f32 accumulation; reference is pure f32
    np.testing.assert_allclose(np.asarray(out), np.asarray(ref), rtol=5e-2, atol=5e-2)

    print("KERNEL_OK")
</pallas_src>

<mosaic_0001>
module attributes {stable_mosaic.version = 11 : i64} {
  func.func @made_mlp_kernel(%arg0: i32, %arg1: memref<8x16xbf16, #tpu.memory_space<vmem>>, %arg2: memref<32x8xbf16, #tpu.memory_space<vmem>>, %arg3: memref<32x1xf32, #tpu.memory_space<vmem>>, %arg4: memref<32x32xbf16, #tpu.memory_space<vmem>>, %arg5: memref<32x1xf32, #tpu.memory_space<vmem>>, %arg6: memref<8x32xbf16, #tpu.memory_space<vmem>>, %arg7: memref<8x1xf32, #tpu.memory_space<vmem>>, %arg8: memref<8x16xf32, #tpu.memory_space<vmem>>) attributes {dimension_semantics = [#tpu.dimension_semantics<parallel>], iteration_bounds = array<i64: 1>, scalar_prefetch = 0 : i64, scratch_operands = 0 : i64, tpu.core_type = #tpu.core_type<tc>, window_params = [{transform_indices = @transform_0, window_bounds = array<i64: 8, 16>}, {pipeline_mode = #tpu.pipeline_mode<synchronous>, transform_indices = @transform_1, window_bounds = array<i64: 32, 8>}, {pipeline_mode = #tpu.pipeline_mode<synchronous>, transform_indices = @transform_2, window_bounds = array<i64: 32, 1>}, {pipeline_mode = #tpu.pipeline_mode<synchronous>, transform_indices = @transform_3, window_bounds = array<i64: 32, 32>}, {pipeline_mode = #tpu.pipeline_mode<synchronous>, transform_indices = @transform_4, window_bounds = array<i64: 32, 1>}, {pipeline_mode = #tpu.pipeline_mode<synchronous>, transform_indices = @transform_5, window_bounds = array<i64: 8, 32>}, {pipeline_mode = #tpu.pipeline_mode<synchronous>, transform_indices = @transform_6, window_bounds = array<i64: 8, 1>}, {transform_indices = @transform_7, window_bounds = array<i64: 8, 16>}]} {
    %c0 = arith.constant 0 : index
    %c0_0 = arith.constant 0 : index
    %0 = vector.load %arg2[%c0, %c0_0] : memref<32x8xbf16, #tpu.memory_space<vmem>>, vector<32x8xbf16>
    %c0_1 = arith.constant 0 : index
    %c0_2 = arith.constant 0 : index
    %1 = vector.load %arg1[%c0_1, %c0_2] : memref<8x16xbf16, #tpu.memory_space<vmem>>, vector<8x16xbf16>
    %cst = arith.constant dense<0.000000e+00> : vector<32x16xf32>
    %2 = tpu.matmul %0, %1, %cst {dimension_numbers = #tpu.dot_dimension_numbers<[1], [0], [0], [1], [0, 0, 1, 1], [], []>} : vector<32x8xbf16>, vector<8x16xbf16>, vector<32x16xf32> -> vector<32x16xf32>
    %c0_3 = arith.constant 0 : index
    %c0_4 = arith.constant 0 : index
    %3 = vector.load %arg3[%c0_3, %c0_4] : memref<32x1xf32, #tpu.memory_space<vmem>>, vector<32x1xf32>
    %4 = vector.broadcast %3 : vector<32x1xf32> to vector<32x16xf32>
    %5 = arith.addf %2, %4 : vector<32x16xf32>
    %cst_5 = arith.constant 0.000000e+00 : f32
    %6 = vector.broadcast %cst_5 : f32 to vector<32x16xf32>
    %7 = arith.maximumf %5, %6 : vector<32x16xf32>
    %8 = arith.truncf %7 : vector<32x16xf32> to vector<32x16xbf16>
    %c0_6 = arith.constant 0 : index
    %c0_7 = arith.constant 0 : index
    %9 = vector.load %arg4[%c0_6, %c0_7] : memref<32x32xbf16, #tpu.memory_space<vmem>>, vector<32x32xbf16>
    %cst_8 = arith.constant dense<0.000000e+00> : vector<32x16xf32>
    %10 = tpu.matmul %9, %8, %cst_8 {dimension_numbers = #tpu.dot_dimension_numbers<[1], [0], [0], [1], [0, 0, 1, 1], [], []>} : vector<32x32xbf16>, vector<32x16xbf16>, vector<32x16xf32> -> vector<32x16xf32>
    %c0_9 = arith.constant 0 : index
    %c0_10 = arith.constant 0 : index
    %11 = vector.load %arg5[%c0_9, %c0_10] : memref<32x1xf32, #tpu.memory_space<vmem>>, vector<32x1xf32>
    %12 = vector.broadcast %11 : vector<32x1xf32> to vector<32x16xf32>
    %13 = arith.addf %10, %12 : vector<32x16xf32>
    %cst_11 = arith.constant 0.000000e+00 : f32
    %14 = vector.broadcast %cst_11 : f32 to vector<32x16xf32>
    %15 = arith.maximumf %13, %14 : vector<32x16xf32>
    %16 = arith.truncf %15 : vector<32x16xf32> to vector<32x16xbf16>
    %c0_12 = arith.constant 0 : index
    %c0_13 = arith.constant 0 : index
    %17 = vector.load %arg6[%c0_12, %c0_13] : memref<8x32xbf16, #tpu.memory_space<vmem>>, vector<8x32xbf16>
    %cst_14 = arith.constant dense<0.000000e+00> : vector<8x16xf32>
    %18 = tpu.matmul %17, %16, %cst_14 {dimension_numbers = #tpu.dot_dimension_numbers<[1], [0], [0], [1], [0, 0, 1, 1], [], []>} : vector<8x32xbf16>, vector<32x16xbf16>, vector<8x16xf32> -> vector<8x16xf32>
    %c0_15 = arith.constant 0 : index
    %c0_16 = arith.constant 0 : index
    %19 = vector.load %arg7[%c0_15, %c0_16] : memref<8x1xf32, #tpu.memory_space<vmem>>, vector<8x1xf32>
    %20 = vector.broadcast %19 : vector<8x1xf32> to vector<8x16xf32>
    %21 = arith.addf %18, %20 : vector<8x16xf32>
    %c0_17 = arith.constant 0 : index
    %c0_18 = arith.constant 0 : index
    %22 = vector.load %arg8[%c0_17, %c0_18] : memref<8x16xf32, #tpu.memory_space<vmem>>, vector<8x16xf32>
    tpu.vector_store %arg8[%c0_17, %c0_18], %21 {strides = array<i32>} : memref<8x16xf32, #tpu.memory_space<vmem>>, vector<8x16xf32>,
    return
  }
  func.func @transform_0(%arg0: i32) -> (i32, i32) {
    %c0_i32 = arith.constant 0 : i32
    %c0_i32_0 = arith.constant 0 : i32
    return %c0_i32, %arg0 : i32, i32
  }
  func.func @transform_1(%arg0: i32) -> (i32, i32) {
    %c0_i32 = arith.constant 0 : i32
    %c0_i32_0 = arith.constant 0 : i32
    %c0_i32_1 = arith.constant 0 : i32
    return %c0_i32, %c0_i32_0 : i32, i32
  }
  func.func @transform_2(%arg0: i32) -> (i32, i32) {
    %c0_i32 = arith.constant 0 : i32
    %c0_i32_0 = arith.constant 0 : i32
    %c0_i32_1 = arith.constant 0 : i32
    return %c0_i32, %c0_i32_0 : i32, i32
  }
  func.func @transform_3(%arg0: i32) -> (i32, i32) {
    %c0_i32 = arith.constant 0 : i32
    %c0_i32_0 = arith.constant 0 : i32
    %c0_i32_1 = arith.constant 0 : i32
    return %c0_i32, %c0_i32_0 : i32, i32
  }
  func.func @transform_4(%arg0: i32) -> (i32, i32) {
    %c0_i32 = arith.constant 0 : i32
    %c0_i32_0 = arith.constant 0 : i32
    %c0_i32_1 = arith.constant 0 : i32
    return %c0_i32, %c0_i32_0 : i32, i32
  }
  func.func @transform_5(%arg0: i32) -> (i32, i32) {
    %c0_i32 = arith.constant 0 : i32
    %c0_i32_0 = arith.constant 0 : i32
    %c0_i32_1 = arith.constant 0 : i32
    return %c0_i32, %c0_i32_0 : i32, i32
  }
  func.func @transform_6(%arg0: i32) -> (i32, i32) {
    %c0_i32 = arith.constant 0 : i32
    %c0_i32_0 = arith.constant 0 : i32
    %c0_i32_1 = arith.constant 0 : i32
    return %c0_i32, %c0_i32_0 : i32, i32
  }
  func.func @transform_7(%arg0: i32) -> (i32, i32) {
    %c0_i32 = arith.constant 0 : i32
    %c0_i32_0 = arith.constant 0 : i32
    return %c0_i32, %arg0 : i32, i32
  }
}

</mosaic_0001>

<llo_original>
// kernel: tpu_custom_call.1
$region0: #{tpu_custom_call.1}
  #allocation0 [shape = 'u32[]', space=smem, size = 0x4, offset = 0x4, fixed_abs, tag = 'smem constant byte address 0x4 - core index']
  #allocation1 [shape = 'u32[72,128]{1,0:T(1,128)}', space=vmem, size = 0x9000, scoped, tag = 'internal scratch']
  %s0 = inlined_call_operand.vmem [shape: bf16[8,16], index: 0, kind: input, shape index: {}]
  %s1 = inlined_call_operand.vmem [shape: bf16[32,8], index: 1, kind: input, shape index: {}]
  %s2 = inlined_call_operand.vmem [shape: f32[32,1], index: 2, kind: input, shape index: {}]
  %s3 = inlined_call_operand.vmem [shape: bf16[32,32], index: 3, kind: input, shape index: {}]
  %s4 = inlined_call_operand.vmem [shape: f32[32,1], index: 4, kind: input, shape index: {}]
  %s5 = inlined_call_operand.vmem [shape: bf16[8,32], index: 5, kind: input, shape index: {}]
  %s6 = inlined_call_operand.vmem [shape: f32[8,1], index: 6, kind: input, shape index: {}]
  %s7 = inlined_call_operand.hbm [shape: f32[8,16], index: 7, kind: output, shape index: {}]
  %s8 = sld [smem:[#allocation0]]
  $region38: #{tpu_custom_call.1} parent=0
    _
  %s10 = ssub.s32 1, %s8
  %s11 = scalar_select 0, %s10, %s8
  $region1: #{tpu_custom_call.1} parent=0
    #allocation2 [shape = 'u8[4096]{0}', space=vmem, size = 0x1000, scoped, tag = 'output window, operand 0, single buffered']
    #allocation3 [shape = 's32[1]{0}', space=sflag, size = 0x4, scoped, tag = 'scoped memory for tpu_custom_call.1']
    %12 = vsyncpa [#allocation3], 0
    // Predicated region
    $region2: #{tpu_custom_call.1} parent=1 // pred_check
      _
    $region3: #{tpu_custom_call.1} parent=1 // pred_check_branch
      %14 = sbr.rel (0) target = $region5
    $region4: #{tpu_custom_call.1} parent=1 // pred_region
      _
    $region5: #{tpu_custom_call.1} parent=1 // pred_fallthru
      _
    // Predicated region
    $region6: #{tpu_custom_call.1} parent=1 // pred_check
      _
    $region7: #{tpu_custom_call.1} parent=1 // pred_check_branch
      %16 = sbr.rel (0) target = $region9
    $region8: #{tpu_custom_call.1} parent=1 // pred_region
      _
    $region9: #{tpu_custom_call.1} parent=1 // pred_fallthru
      _
    // Predicated region
    $region10: #{tpu_custom_call.1} parent=1 // pred_check
      _
    $region11: #{tpu_custom_call.1} parent=1 // pred_check_branch
      %18 = sbr.rel (0) target = $region13
    $region12: #{tpu_custom_call.1} parent=1 // pred_region
      _
    $region13: #{tpu_custom_call.1} parent=1 // pred_fallthru
      _
    // Predicated region
    $region14: #{tpu_custom_call.1} parent=1 // pred_check
      _
    $region15: #{tpu_custom_call.1} parent=1 // pred_check_branch
      %20 = sbr.rel (0) target = $region17
    $region16: #{tpu_custom_call.1} parent=1 // pred_region
      _
    $region17: #{tpu_custom_call.1} parent=1 // pred_fallthru
      _
    // Predicated region
    $region18: #{tpu_custom_call.1} parent=1 // pred_check
      _
    $region19: #{tpu_custom_call.1} parent=1 // pred_check_branch
      %22 = sbr.rel (0) target = $region21
    $region20: #{tpu_custom_call.1} parent=1 // pred_region
      _
    $region21: #{tpu_custom_call.1} parent=1 // pred_fallthru
      _
    // Predicated region
    $region22: #{tpu_custom_call.1} parent=1 // pred_check
      _
    $region23: #{tpu_custom_call.1} parent=1 // pred_check_branch
      %24 = sbr.rel (0) target = $region25
    $region24: #{tpu_custom_call.1} parent=1 // pred_region
      _
    $region25: #{tpu_custom_call.1} parent=1 // pred_fallthru
      _
    // Predicated region
    $region26: #{tpu_custom_call.1} parent=1 // pred_check
      _
    $region27: #{tpu_custom_call.1} parent=1 // pred_check_branch
      %26 = sbr.rel (0) target = $region29
    $region28: #{tpu_custom_call.1} parent=1 // pred_region
      _
    $region29: #{tpu_custom_call.1} parent=1 // pred_fallthru
      _
    %v28 = vld [vmem:[%s1] sm:$0xf]
    %v29 = vld [vmem:[%s1 + $0x4] sm:$0xf]
    %v30 = vld [vmem:[%s1 + $0x8] sm:$0xf]
    %v31 = vld [vmem:[%s1 + $0xc] sm:$0xf]
    %v32 = vld [vmem:[%s0] sm:$0xf]
    %v33 = vld [vmem:[%s2] sm:$0xff]
    %v34 = vld [vmem:[%s2 + $0x8] sm:$0xff]
    %v35 = vld [vmem:[%s2 + $0x10] sm:$0xff]
    %v36 = vld [vmem:[%s2 + $0x18] sm:$0xff]
    %38 = vset.pattern.permute.xlu0 0
    %39 = vperm.xlu0 %38, %v33
    %v40 = vpop.permute.xlu0 %39
    %43 = vset.pattern.permute.xlu0 0
    %44 = vperm.xlu0 %43, %v34
    %v45 = vpop.permute.xlu0 %44
    %48 = vset.pattern.permute.xlu0 0
    %49 = vperm.xlu0 %48, %v35
    %v50 = vpop.permute.xlu0 %49
    %53 = vset.pattern.permute.xlu0 0
    %54 = vperm.xlu0 %53, %v36
    %v55 = vpop.permute.xlu0 %54
    %v61 = vunpack.c.l.b16 %v28
    %v62 = vunpack.c.l.b16 %v29
    %v63 = vunpack.c.l.b16 %v30
    %v64 = vunpack.c.l.b16 %v31
    %v65 = vpack.c.b16 %v62, %v61
    %v66 = vpack.c.b16 %v64, %v63
    %vm67 = vcmask 64512
    %v69 = vsel %vm67, %v65, 0
    %v72 = vsel %vm67, %v66, 0
    %vm74 = vcmask 1043456
    %v76 = vsel %vm74, %v32, 0
    %78 = vmatpush.bf16.msra.mxu0 0
    %79 = vmatpush.bf16.msra.mxu0 0
    %80 = vmatpush.bf16.msra.mxu0 0
    %81 = vmatpush.bf16.msra.mxu0 0
    %82 = vmatpush.bf16.msra.mxu0 0
    %83 = vmatpush.bf16.msra.mxu0 0
    %84 = vmatpush.bf16.msra.mxu0 0
    %85 = vmatpush.bf16.msra.mxu0 %v76
    %86 = vmatmul.bf16.gmra.mxu0 %v69
    %v87 = vpop.f32.mrf.mxu0
    %v88 = vadd.f32 %v40, %v87
    %v89 = vpop.f32.mrf.mxu0
    %v90 = vadd.f32 %v45, %v89
    %91 = vmatmul.bf16.gmra.mxu0 %v72
    %v92 = vpop.f32.mrf.mxu0
    %v93 = vadd.f32 %v50, %v92
    %v94 = vpop.f32.mrf.mxu0
    %v95 = vadd.f32 %v55, %v94
    %96 = vdwg.mxu0
    %v97 = vmax.f32 %v88, 0.0
    %v98 = vmax.f32 %v90, 0.0
    %v99 = vmax.f32 %v93, 0.0
    %v100 = vmax.f32 %v95, 0.0
    %v101 = vpack.c.bf16 %v98, %v97
    %v102 = vpack.c.bf16 %v100, %v99
    %v103 = vld [vmem:[%s3] sm:$0xf]
    %v104 = vld [vmem:[%s3 + $0x4] sm:$0xf]
    %v105 = vld [vmem:[%s3 + $0x8] sm:$0xf]
    %v106 = vld [vmem:[%s3 + $0xc] sm:$0xf]
    %v107 = vld [vmem:[%s4] sm:$0xff]
    %v108 = vld [vmem:[%s4 + $0x8] sm:$0xff]
    %v109 = vld [vmem:[%s4 + $0x10] sm:$0xff]
    %v110 = vld [vmem:[%s4 + $0x18] sm:$0xff]
    %112 = vset.pattern.permute.xlu0 0
    %113 = vperm.xlu0 %112, %v107
    %v114 = vpop.permute.xlu0 %113
    %117 = vset.pattern.permute.xlu0 0
    %118 = vperm.xlu0 %117, %v108
    %v119 = vpop.permute.xlu0 %118
    %122 = vset.pattern.permute.xlu0 0
    %123 = vperm.xlu0 %122, %v109
    %v124 = vpop.permute.xlu0 %123
    %127 = vset.pattern.permute.xlu0 0
    %128 = vperm.xlu0 %127, %v110
    %v129 = vpop.permute.xlu0 %128
    %v135 = vunpack.c.l.b16 %v103
    %v136 = vunpack.c.l.b16 %v104
    %v137 = vunpack.c.l.b16 %v105
    %v138 = vunpack.c.l.b16 %v106
    %v139 = vpack.c.b16 %v136, %v135
    %v140 = vpack.c.b16 %v138, %v137
    %vm141 = vcmask 261120
    %v143 = vsel %vm141, %v139, 0
    %v146 = vsel %vm141, %v140, 0
    %148 = vmatpush.bf16.msra.mxu0 0
    %149 = vmatpush.bf16.msra.mxu0 0
    %150 = vmatpush.bf16.msra.mxu0 0
    %151 = vmatpush.bf16.msra.mxu0 0
    %152 = vmatpush.bf16.msra.mxu0 0
    %153 = vmatpush.bf16.msra.mxu0 0
    %154 = vmatpush.bf16.msra.mxu0 %v102
    %155 = vmatpush.bf16.msra.mxu0 %v101
    %156 = vmatmul.bf16.gmra.mxu0 %v143
    %v157 = vpop.f32.mrf.mxu0
    %v158 = vadd.f32 %v114, %v157
    %v159 = vpop.f32.mrf.mxu0
    %v160 = vadd.f32 %v119, %v159
    %161 = vmatmul.bf16.gmra.mxu0 %v146
    %v162 = vpop.f32.mrf.mxu0
    %v163 = vadd.f32 %v124, %v162
    %v164 = vpop.f32.mrf.mxu0
    %v165 = vadd.f32 %v129, %v164
    %166 = vdwg.mxu0
    %v167 = vmax.f32 %v158, 0.0
    %v168 = vmax.f32 %v160, 0.0
    %v169 = vmax.f32 %v163, 0.0
    %v170 = vmax.f32 %v165, 0.0
    %v171 = vpack.c.bf16 %v168, %v167
    %v172 = vpack.c.bf16 %v170, %v169
    %v173 = vld [vmem:[%s5] sm:$0xf]
    %v174 = vld [vmem:[%s6] sm:$0xff]
    %176 = vset.pattern.permute.xlu0 0
    %177 = vperm.xlu0 %176, %v174
    %v178 = vpop.permute.xlu0 %177
    %v181 = vsel %vm141, %v173, 0
    %183 = vmatpush.bf16.msra.mxu0 0
    %184 = vmatpush.bf16.msra.mxu0 0
    %185 = vmatpush.bf16.msra.mxu0 0
    %186 = vmatpush.bf16.msra.mxu0 0
    %187 = vmatpush.bf16.msra.mxu0 0
    %188 = vmatpush.bf16.msra.mxu0 0
    %189 = vmatpush.bf16.msra.mxu0 %v172
    %190 = vmatpush.bf16.msra.mxu0 %v171
    %191 = vmatmul.bf16.gmra.mxu0 %v181
    %v192 = vpop.f32.mrf.mxu0
    %v193 = vadd.f32 %v178, %v192
    %v194 = vpop.f32.mrf.mxu0
    %195 = vdwg.mxu0
    %vm196 = vcmask 130048
    %197 = vst.msk [vmem:[#allocation2] sm:$0xff] %vm196, %v193
    // Predicated region
    $region30: #{tpu_custom_call.1} parent=1 // pred_check
      _
    $region31: #{tpu_custom_call.1} parent=1 // pred_check_branch
      %199 = sbr.rel (0) target = $region33
    $region32: #{tpu_custom_call.1} parent=1 // pred_region
      %201 = vsyncadd [#allocation3], 0
      %s203 = sshll.u32 [#allocation2], 4
      %s204 = int_to_ptr.vmem [resolvable:$true] %s203
      %s205 = sshll.u32 %s7, 4
      %s206 = int_to_ptr.hbm [resolvable:$true] %s205
      %208 = dma.vmem_to_hbm [thread:$0]  %s204, 128, %s206, [#allocation3]
    $region33: #{tpu_custom_call.1} parent=1 // pred_fallthru
      _
    // Predicated region
    $region34: #{tpu_custom_call.1} parent=1 // pred_check
      _
    $region35: #{tpu_custom_call.1} parent=1 // pred_check_branch
      %210 = sbr.rel (0) target = $region37
    $region36: #{tpu_custom_call.1} parent=1 // pred_region
      %212 = dma.done [#allocation3], 128
    $region37: #{tpu_custom_call.1} parent=1 // pred_fallthru
      _
    %213 = vsyncpa [#allocation3], 1

</llo_original>
